<compile_context>
chip_gen: v6e
topology: v6e:2x2x1
jax: 0.10.0
libtpu: 0.0.40
codegen_flags: <defaults>
</compile_context>

<pallas_src>
import jax
import jax.numpy as jnp
from jax.experimental import pallas as pl
from jax.experimental.pallas import tpu as pltpu

INPUT_DIM = 31
HIDDEN = 256
OUTPUT_DIM = 4
MAX_U = 1.0
LOG_STD_MIN = -5.0
LOG_STD_MAX = 2.0

IN_PAD = 32                                   # 31 features rounded up to a sublane multiple
HEAD_W = 2 * OUTPUT_DIM                       # fused mu || log_std head width
HALF_RANGE = 0.5 * (LOG_STD_MAX - LOG_STD_MIN)
LS_OFFSET = LOG_STD_MIN + HALF_RANGE          # log_std = HALF_RANGE * tanh + LS_OFFSET


def _round_up(n, m):
    return ((n + m - 1) // m) * m


def actor_kernel(x_ref,
                 w1_ref, b1_ref,
                 w2_ref, b2_ref,
                 wh_ref, bh_ref,
                 mu_ref, ls_ref):
    # fc1 + relu  (x / w1 zero-padded 31 -> 32 features; pad contributes exact zeros)
    h = jnp.dot(x_ref[...], w1_ref[...], preferred_element_type=jnp.float32) + b1_ref[...]
    h = jnp.maximum(h, 0.0)

    # fc2 + relu
    h = jnp.dot(h, w2_ref[...], preferred_element_type=jnp.float32) + b2_ref[...]
    h = jnp.maximum(h, 0.0)

    # fc3 folded into the fused (mu || log_std) head at pack time:
    # one (HIDDEN, 8) matmul + one shared tanh, then per-head affine epilogue.
    t = jnp.tanh(
        jnp.dot(h, wh_ref[...], preferred_element_type=jnp.float32) + bh_ref[...]
    )
    mu_ref[...] = (t[:, :OUTPUT_DIM] * MAX_U).astype(mu_ref.dtype)
    ls_ref[...] = (HALF_RANGE * t[:, OUTPUT_DIM:] + LS_OFFSET).astype(ls_ref.dtype)


def pack_params(params):
    """Repack Linear params into the padded, fc3-folded, fused-head layout."""
    (w1, b1, w2, b2, w3, b3, wmu, bmu, wls, bls) = params

    # Pad fc1 weight rows 31 -> 32 with zeros (matches the padded input lanes).
    w1p = jnp.zeros((IN_PAD, HIDDEN), jnp.float32).at[:INPUT_DIM, :].set(w1)

    # Fuse the two heads, then fold fc3 (no activation) into them.
    # HIGHEST precision so the pack-time fold does not add bf16-level error.
    hp = jax.lax.Precision.HIGHEST
    wh = jnp.concatenate([wmu, wls], axis=1)                      # (HIDDEN, 8)
    bh = jnp.concatenate([bmu, bls], axis=1)                      # (1, 8)
    w3h = jnp.dot(w3, wh, precision=hp)                           # (HIDDEN, 8)
    b3h = jnp.dot(b3, wh, precision=hp) + bh                      # (1, 8)

    return (w1p, b1, w2, b2, w3h, b3h)


def actor_forward(x, packed_params, *, bm=None):
    """x: (B, INPUT_DIM) float32.  Returns (mu, log_std), each (B, OUTPUT_DIM)."""
    B, D = x.shape
    assert D == INPUT_DIM

    if bm is None:
        if B <= 256:
            # Small batches: single grid step, whole batch as one block.
            bm = _round_up(B, 8)
        else:
            # Larger batches: >= 2 grid steps so both v7x TensorCores get work,
            # tiles are multiples of 256 rows (full MXU M on v6e/v7x), capped at
            # 1024 rows (safe for v5e's 16 MiB scoped VMEM, 1 vst slot).
            b_guess = _round_up(B, 256)
            bm = min(1024, max(256, _round_up(b_guess // 2, 256)))
    B_pad = _round_up(B, bm)

    # Pad batch rows (to the tile) and features 31 -> 32 with exact zeros.
    xp = jnp.zeros((B_pad, IN_PAD), jnp.float32).at[:B, :INPUT_DIM].set(x)

    def resident(arr):
        # Whole-array block with a constant index map -> stays resident in VMEM
        # across grid steps (no per-step re-DMA).
        return pl.BlockSpec(arr.shape, lambda i: (0, 0))

    in_specs = [pl.BlockSpec((bm, IN_PAD), lambda i: (i, 0))]
    in_specs += [resident(a) for a in packed_params]

    out_specs = (
        pl.BlockSpec((bm, OUTPUT_DIM), lambda i: (i, 0)),
        pl.BlockSpec((bm, OUTPUT_DIM), lambda i: (i, 0)),
    )
    out_shape = (
        jax.ShapeDtypeStruct((B_pad, OUTPUT_DIM), jnp.float32),
        jax.ShapeDtypeStruct((B_pad, OUTPUT_DIM), jnp.float32),
    )

    mu, log_std = pl.pallas_call(
        actor_kernel,
        out_shape=out_shape,
        grid=(B_pad // bm,),
        in_specs=in_specs,
        out_specs=out_specs,
        compiler_params=pltpu.CompilerParams(
            dimension_semantics=("parallel",),
        ),
    )(xp, *packed_params)

    if B_pad != B:
        mu, log_std = mu[:B], log_std[:B]
    return mu, log_std


def init_params(key):
    """Deterministic synthetic params.  Linear(in, out) stored as W:(in, out), b:(1, out)."""
    def linear(key, fan_in, fan_out):
        kw, kb = jax.random.split(key)
        bound = 1.0 / jnp.sqrt(fan_in)
        w = jax.random.uniform(kw, (fan_in, fan_out), jnp.float32, -bound, bound)
        b = jax.random.uniform(kb, (1, fan_out), jnp.float32, -bound, bound)
        return w, b

    keys = jax.random.split(key, 5)
    w1, b1 = linear(keys[0], INPUT_DIM, HIDDEN)
    w2, b2 = linear(keys[1], HIDDEN, HIDDEN)
    w3, b3 = linear(keys[2], HIDDEN, HIDDEN)
    wmu, bmu = linear(keys[3], HIDDEN, OUTPUT_DIM)
    wls, bls = linear(keys[4], HIDDEN, OUTPUT_DIM)
    return (w1, b1, w2, b2, w3, b3, wmu, bmu, wls, bls)


def actor_reference(x, params):
    """Pure-JAX reference matching the PyTorch forward semantics."""
    (w1, b1, w2, b2, w3, b3, wmu, bmu, wls, bls) = params
    h = jax.nn.relu(x @ w1 + b1)
    h = jax.nn.relu(h @ w2 + b2)
    h = h @ w3 + b3
    mu = jnp.tanh(h @ wmu + bmu) * MAX_U
    ls = jnp.tanh(h @ wls + bls)
    ls = LOG_STD_MIN + 0.5 * (LOG_STD_MAX - LOG_STD_MIN) * (ls + 1.0)
    return mu, ls


if __name__ == "__main__":
    key = jax.random.PRNGKey(0)
    kx, kp, kx2 = jax.random.split(key, 3)

    params = init_params(kp)
    packed = pack_params(params)

    # Case 1: small batch -> single grid step, whole batch as one block.
    B = 64
    x = jax.random.normal(kx, (B, INPUT_DIM), jnp.float32)
    mu, log_std = actor_forward(x, packed)
    mu, log_std = jax.block_until_ready((mu, log_std))

    mu_ref, ls_ref = actor_reference(x, params)
    assert mu.shape == (B, OUTPUT_DIM) and log_std.shape == (B, OUTPUT_DIM)
    assert jnp.allclose(mu, mu_ref, atol=1e-5, rtol=1e-5)
    assert jnp.allclose(log_std, ls_ref, atol=1e-5, rtol=1e-5)

    # Case 2: non-multiple batch -> multi-step grid with row padding (exercises
    # the >=2-step / parallel-axis path used for larger batches).
    B2 = 300
    x2 = jax.random.normal(kx2, (B2, INPUT_DIM), jnp.float32)
    mu2, ls2 = actor_forward(x2, packed)
    mu2, ls2 = jax.block_until_ready((mu2, ls2))

    mu2_ref, ls2_ref = actor_reference(x2, params)
    assert mu2.shape == (B2, OUTPUT_DIM) and ls2.shape == (B2, OUTPUT_DIM)
    assert jnp.allclose(mu2, mu2_ref, atol=1e-5, rtol=1e-5)
    assert jnp.allclose(ls2, ls2_ref, atol=1e-5, rtol=1e-5)

    print("KERNEL_OK")
</pallas_src>

<mosaic_0001>
module attributes {stable_mosaic.version = 11 : i64} {
  func.func @actor_kernel(%arg0: i32, %arg1: memref<64x32xf32, #tpu.memory_space<vmem>>, %arg2: memref<32x256xf32, #tpu.memory_space<vmem>>, %arg3: memref<1x256xf32, #tpu.memory_space<vmem>>, %arg4: memref<256x256xf32, #tpu.memory_space<vmem>>, %arg5: memref<1x256xf32, #tpu.memory_space<vmem>>, %arg6: memref<256x8xf32, #tpu.memory_space<vmem>>, %arg7: memref<1x8xf32, #tpu.memory_space<vmem>>, %arg8: memref<64x4xf32, #tpu.memory_space<vmem>>, %arg9: memref<64x4xf32, #tpu.memory_space<vmem>>) attributes {dimension_semantics = [#tpu.dimension_semantics<parallel>], iteration_bounds = array<i64: 1>, scalar_prefetch = 0 : i64, scratch_operands = 0 : i64, tpu.core_type = #tpu.core_type<tc>, window_params = [{transform_indices = @transform_0, window_bounds = array<i64: 64, 32>}, {pipeline_mode = #tpu.pipeline_mode<synchronous>, transform_indices = @transform_1, window_bounds = array<i64: 32, 256>}, {pipeline_mode = #tpu.pipeline_mode<synchronous>, transform_indices = @transform_2, window_bounds = array<i64: 1, 256>}, {pipeline_mode = #tpu.pipeline_mode<synchronous>, transform_indices = @transform_3, window_bounds = array<i64: 256, 256>}, {pipeline_mode = #tpu.pipeline_mode<synchronous>, transform_indices = @transform_4, window_bounds = array<i64: 1, 256>}, {pipeline_mode = #tpu.pipeline_mode<synchronous>, transform_indices = @transform_5, window_bounds = array<i64: 256, 8>}, {pipeline_mode = #tpu.pipeline_mode<synchronous>, transform_indices = @transform_6, window_bounds = array<i64: 1, 8>}, {transform_indices = @transform_7, window_bounds = array<i64: 64, 4>}, {transform_indices = @transform_8, window_bounds = array<i64: 64, 4>}]} {
    %c0 = arith.constant 0 : index
    %c0_0 = arith.constant 0 : index
    %0 = vector.load %arg1[%c0, %c0_0] : memref<64x32xf32, #tpu.memory_space<vmem>>, vector<64x32xf32>
    %c0_1 = arith.constant 0 : index
    %c0_2 = arith.constant 0 : index
    %1 = vector.load %arg2[%c0_1, %c0_2] : memref<32x256xf32, #tpu.memory_space<vmem>>, vector<32x256xf32>
    %cst = arith.constant dense<0.000000e+00> : vector<64x256xf32>
    %2 = tpu.matmul %0, %1, %cst {dimension_numbers = #tpu.dot_dimension_numbers<[1], [0], [0], [1], [0, 0, 1, 1], [], []>} : vector<64x32xf32>, vector<32x256xf32>, vector<64x256xf32> -> vector<64x256xf32>
    %c0_3 = arith.constant 0 : index
    %c0_4 = arith.constant 0 : index
    %3 = vector.load %arg3[%c0_3, %c0_4] : memref<1x256xf32, #tpu.memory_space<vmem>>, vector<1x256xf32>
    %4 = vector.broadcast %3 : vector<1x256xf32> to vector<64x256xf32>
    %5 = arith.addf %2, %4 : vector<64x256xf32>
    %cst_5 = arith.constant 0.000000e+00 : f32
    %6 = vector.broadcast %cst_5 : f32 to vector<64x256xf32>
    %7 = arith.maximumf %5, %6 : vector<64x256xf32>
    %c0_6 = arith.constant 0 : index
    %c0_7 = arith.constant 0 : index
    %8 = vector.load %arg4[%c0_6, %c0_7] : memref<256x256xf32, #tpu.memory_space<vmem>>, vector<256x256xf32>
    %cst_8 = arith.constant dense<0.000000e+00> : vector<64x256xf32>
    %9 = tpu.matmul %7, %8, %cst_8 {dimension_numbers = #tpu.dot_dimension_numbers<[1], [0], [0], [1], [0, 0, 1, 1], [], []>} : vector<64x256xf32>, vector<256x256xf32>, vector<64x256xf32> -> vector<64x256xf32>
    %c0_9 = arith.constant 0 : index
    %c0_10 = arith.constant 0 : index
    %10 = vector.load %arg5[%c0_9, %c0_10] : memref<1x256xf32, #tpu.memory_space<vmem>>, vector<1x256xf32>
    %11 = vector.broadcast %10 : vector<1x256xf32> to vector<64x256xf32>
    %12 = arith.addf %9, %11 : vector<64x256xf32>
    %cst_11 = arith.constant 0.000000e+00 : f32
    %13 = vector.broadcast %cst_11 : f32 to vector<64x256xf32>
    %14 = arith.maximumf %12, %13 : vector<64x256xf32>
    %c0_12 = arith.constant 0 : index
    %c0_13 = arith.constant 0 : index
    %15 = vector.load %arg6[%c0_12, %c0_13] : memref<256x8xf32, #tpu.memory_space<vmem>>, vector<256x8xf32>
    %cst_14 = arith.constant dense<0.000000e+00> : vector<64x8xf32>
    %16 = tpu.matmul %14, %15, %cst_14 {dimension_numbers = #tpu.dot_dimension_numbers<[1], [0], [0], [1], [0, 0, 1, 1], [], []>} : vector<64x256xf32>, vector<256x8xf32>, vector<64x8xf32> -> vector<64x8xf32>
    %c0_15 = arith.constant 0 : index
    %c0_16 = arith.constant 0 : index
    %17 = vector.load %arg7[%c0_15, %c0_16] : memref<1x8xf32, #tpu.memory_space<vmem>>, vector<1x8xf32>
    %18 = vector.broadcast %17 : vector<1x8xf32> to vector<64x8xf32>
    %19 = arith.addf %16, %18 : vector<64x8xf32>
    %20 = math.tanh %19 : vector<64x8xf32>
    %21 = vector.extract_strided_slice %20 {offsets = [0, 0], sizes = [64, 4], strides = [1, 1]} : vector<64x8xf32> to vector<64x4xf32>
    %cst_17 = arith.constant 1.000000e+00 : f32
    %22 = vector.broadcast %cst_17 : f32 to vector<64x4xf32>
    %23 = arith.mulf %21, %22 : vector<64x4xf32>
    %c0_18 = arith.constant 0 : index
    %c0_19 = arith.constant 0 : index
    %24 = vector.load %arg8[%c0_18, %c0_19] : memref<64x4xf32, #tpu.memory_space<vmem>>, vector<64x4xf32>
    tpu.vector_store %arg8[%c0_18, %c0_19], %23 {strides = array<i32>} : memref<64x4xf32, #tpu.memory_space<vmem>>, vector<64x4xf32>,
    %25 = vector.extract_strided_slice %20 {offsets = [0, 4], sizes = [64, 4], strides = [1, 1]} : vector<64x8xf32> to vector<64x4xf32>
    %cst_20 = arith.constant 3.500000e+00 : f32
    %26 = vector.broadcast %cst_20 : f32 to vector<64x4xf32>
    %27 = arith.mulf %26, %25 : vector<64x4xf32>
    %cst_21 = arith.constant -1.500000e+00 : f32
    %28 = vector.broadcast %cst_21 : f32 to vector<64x4xf32>
    %29 = arith.addf %27, %28 : vector<64x4xf32>
    %c0_22 = arith.constant 0 : index
    %c0_23 = arith.constant 0 : index
    %30 = vector.load %arg9[%c0_22, %c0_23] : memref<64x4xf32, #tpu.memory_space<vmem>>, vector<64x4xf32>
    tpu.vector_store %arg9[%c0_22, %c0_23], %29 {strides = array<i32>} : memref<64x4xf32, #tpu.memory_space<vmem>>, vector<64x4xf32>,
    return
  }
  func.func @transform_0(%arg0: i32) -> (i32, i32) {
    %c0_i32 = arith.constant 0 : i32
    %c0_i32_0 = arith.constant 0 : i32
    return %arg0, %c0_i32 : i32, i32
  }
  func.func @transform_1(%arg0: i32) -> (i32, i32) {
    %c0_i32 = arith.constant 0 : i32
    %c0_i32_0 = arith.constant 0 : i32
    %c0_i32_1 = arith.constant 0 : i32
    return %c0_i32, %c0_i32_0 : i32, i32
  }
  func.func @transform_2(%arg0: i32) -> (i32, i32) {
    %c0_i32 = arith.constant 0 : i32
    %c0_i32_0 = arith.constant 0 : i32
    %c0_i32_1 = arith.constant 0 : i32
    return %c0_i32, %c0_i32_0 : i32, i32
  }
  func.func @transform_3(%arg0: i32) -> (i32, i32) {
    %c0_i32 = arith.constant 0 : i32
    %c0_i32_0 = arith.constant 0 : i32
    %c0_i32_1 = arith.constant 0 : i32
    return %c0_i32, %c0_i32_0 : i32, i32
  }
  func.func @transform_4(%arg0: i32) -> (i32, i32) {
    %c0_i32 = arith.constant 0 : i32
    %c0_i32_0 = arith.constant 0 : i32
    %c0_i32_1 = arith.constant 0 : i32
    return %c0_i32, %c0_i32_0 : i32, i32
  }
  func.func @transform_5(%arg0: i32) -> (i32, i32) {
    %c0_i32 = arith.constant 0 : i32
    %c0_i32_0 = arith.constant 0 : i32
    %c0_i32_1 = arith.constant 0 : i32
    return %c0_i32, %c0_i32_0 : i32, i32
  }
  func.func @transform_6(%arg0: i32) -> (i32, i32) {
    %c0_i32 = arith.constant 0 : i32
    %c0_i32_0 = arith.constant 0 : i32
    %c0_i32_1 = arith.constant 0 : i32
    return %c0_i32, %c0_i32_0 : i32, i32
  }
  func.func @transform_7(%arg0: i32) -> (i32, i32) {
    %c0_i32 = arith.constant 0 : i32
    %c0_i32_0 = arith.constant 0 : i32
    return %arg0, %c0_i32 : i32, i32
  }
  func.func @transform_8(%arg0: i32) -> (i32, i32) {
    %c0_i32 = arith.constant 0 : i32
    %c0_i32_0 = arith.constant 0 : i32
    return %arg0, %c0_i32 : i32, i32
  }
}

</mosaic_0001>

<llo_original>
// kernel: tpu_custom_call.1
$region0: #{tpu_custom_call.1}
  #allocation0 [shape = 'u32[]', space=smem, size = 0x4, offset = 0x4, fixed_abs, tag = 'smem constant byte address 0x4 - core index']
  #allocation1 [shape = 'u32[144,128]{1,0:T(1,128)}', space=vmem, size = 0x12000, scoped, tag = 'internal scratch']
  %s0 = inlined_call_operand.vmem [shape: f32[64,32], index: 0, kind: input, shape index: {}]
  %s1 = inlined_call_operand.vmem [shape: f32[32,256], index: 1, kind: input, shape index: {}]
  %s2 = inlined_call_operand.vmem [shape: f32[1,256], index: 2, kind: input, shape index: {}]
  %s3 = inlined_call_operand.hbm [shape: f32[256,256], index: 3, kind: input, shape index: {}]
  %s4 = inlined_call_operand.vmem [shape: f32[1,256], index: 4, kind: input, shape index: {}]
  %s5 = inlined_call_operand.vmem [shape: f32[256,8], index: 5, kind: input, shape index: {}]
  %s6 = inlined_call_operand.vmem [shape: f32[1,8], index: 6, kind: input, shape index: {}]
  %s7 = inlined_call_operand.vmem [shape: f32[64,4], index: 7, kind: output, shape index: {0}]
  %s8 = inlined_call_operand.vmem [shape: f32[64,4], index: 8, kind: output, shape index: {1}]
  %9 = xla_tuple %s7, %s8
  %s10 = sld [smem:[#allocation0]]
  $region50: #{tpu_custom_call.1} parent=0
    _
  %s12 = ssub.s32 1, %s10
  %s13 = scalar_select 0, %s12, %s10
  $region1: #{tpu_custom_call.1} parent=0
    #allocation2 [shape = 'u8[262144]{0}', space=vmem, size = 0x40000, scoped, tag = 'input window, operand 3, single buffered']
    #allocation3 [shape = 's32[1]{0}', space=sflag, size = 0x4, scoped, tag = 'scoped memory for tpu_custom_call.1']
    %14 = vsyncpa [#allocation3], 0
    // Predicated region
    $region2: #{tpu_custom_call.1} parent=1 // pred_check
      _
    $region3: #{tpu_custom_call.1} parent=1 // pred_check_branch
      %16 = sbr.rel (0) target = $region5
    $region4: #{tpu_custom_call.1} parent=1 // pred_region
      _
    $region5: #{tpu_custom_call.1} parent=1 // pred_fallthru
      _
    // Predicated region
    $region6: #{tpu_custom_call.1} parent=1 // pred_check
      _
    $region7: #{tpu_custom_call.1} parent=1 // pred_check_branch
      %18 = sbr.rel (0) target = $region9
    $region8: #{tpu_custom_call.1} parent=1 // pred_region
      _
    $region9: #{tpu_custom_call.1} parent=1 // pred_fallthru
      _
    // Predicated region
    $region10: #{tpu_custom_call.1} parent=1 // pred_check
      _
    $region11: #{tpu_custom_call.1} parent=1 // pred_check_branch
      %20 = sbr.rel (0) target = $region13
    $region12: #{tpu_custom_call.1} parent=1 // pred_region
      _
    $region13: #{tpu_custom_call.1} parent=1 // pred_fallthru
      _
    // Predicated region
    $region14: #{tpu_custom_call.1} parent=1 // pred_check
      _
    $region15: #{tpu_custom_call.1} parent=1 // pred_check_branch
      %22 = sbr.rel (0) target = $region17
    $region16: #{tpu_custom_call.1} parent=1 // pred_region
      %s24 = ssub.s32 8192, 8192
      %25 = vsyncadd [#allocation3], %s24
      %s26 = sshll.u32 [#allocation2], 4
      %s27 = int_to_ptr.vmem [resolvable:$true] %s26
      %32 = dma.hbm_to_vmem [thread:$0]  %s3, 8192, %s27, [#allocation3], 256, 256, 16
    $region17: #{tpu_custom_call.1} parent=1 // pred_fallthru
      _
    // Predicated region
    $region18: #{tpu_custom_call.1} parent=1 // pred_check
      _
    $region19: #{tpu_custom_call.1} parent=1 // pred_check_branch
      %34 = sbr.rel (0) target = $region21
    $region20: #{tpu_custom_call.1} parent=1 // pred_region
      _
    $region21: #{tpu_custom_call.1} parent=1 // pred_fallthru
      _
    // Predicated region
    $region22: #{tpu_custom_call.1} parent=1 // pred_check
      _
    $region23: #{tpu_custom_call.1} parent=1 // pred_check_branch
      %36 = sbr.rel (0) target = $region25
    $region24: #{tpu_custom_call.1} parent=1 // pred_region
      _
    $region25: #{tpu_custom_call.1} parent=1 // pred_fallthru
      _
    // Predicated region
    $region26: #{tpu_custom_call.1} parent=1 // pred_check
      _
    $region27: #{tpu_custom_call.1} parent=1 // pred_check_branch
      %38 = sbr.rel (0) target = $region29
    $region28: #{tpu_custom_call.1} parent=1 // pred_region
      _
    $region29: #{tpu_custom_call.1} parent=1 // pred_fallthru
      _
    // Predicated region
    $region30: #{tpu_custom_call.1} parent=1 // pred_check
      _
    $region31: #{tpu_custom_call.1} parent=1 // pred_check_branch
      %40 = sbr.rel (0) target = $region33
    $region32: #{tpu_custom_call.1} parent=1 // pred_region
      %41 = dma.done [#allocation3], 8192
    $region33: #{tpu_custom_call.1} parent=1 // pred_fallthru
      _
    %v42 = vld [vmem:[%s0] sm:$0xff]
    %v43 = vld [vmem:[%s0 + $0x8] sm:$0xff]
    %v44 = vld [vmem:[%s0 + $0x10] sm:$0xff]
    %v45 = vld [vmem:[%s0 + $0x18] sm:$0xff]
    %v46 = vld [vmem:[%s0 + $0x20] sm:$0xff]
    %v47 = vld [vmem:[%s0 + $0x28] sm:$0xff]
    %v48 = vld [vmem:[%s0 + $0x30] sm:$0xff]
    %v49 = vld [vmem:[%s0 + $0x38] sm:$0xff]
    %v50 = vld [vmem:[%s1] sm:$0xff]
    %v51 = vld [vmem:[%s1 + $0x8] sm:$0xff]
    %v52 = vld [vmem:[%s1 + $0x10] sm:$0xff]
    %v53 = vld [vmem:[%s1 + $0x18] sm:$0xff]
    %v54 = vld [vmem:[%s1 + $0x20] sm:$0xff]
    %v55 = vld [vmem:[%s1 + $0x28] sm:$0xff]
    %v56 = vld [vmem:[%s1 + $0x30] sm:$0xff]
    %v57 = vld [vmem:[%s1 + $0x38] sm:$0xff]
    %v58 = vld [vmem:[%s2] sm:$0x3]
    %v60 = vlaneseq
    %v61 = vshrl.u32 %v60, 7
    %v62 = vsub.s32 0, %v61
    %v63 = vrot.slane %v58, %v62
    %v64 = vlaneseq
    %v65 = vshrl.u32 %v64, 7
    %v66 = vsub.s32 1, %v65
    %v67 = vrot.slane %v58, %v66
    %vm70 = vcmask 261120
    %v72 = vsel %vm70, %v42, 0
    %v75 = vsel %vm70, %v43, 0
    %v78 = vsel %vm70, %v44, 0
    %v81 = vsel %vm70, %v45, 0
    %v84 = vsel %vm70, %v46, 0
    %v87 = vsel %vm70, %v47, 0
    %v90 = vsel %vm70, %v48, 0
    %v93 = vsel %vm70, %v49, 0
    %95 = vmatprep.subr.mxu0 0.0
    %96 = vmatpush1.msra.mxu0 0.0
    %97 = vmatprep.subr.mxu0 0.0
    %98 = vmatpush1.msra.mxu0 0.0
    %99 = vmatprep.subr.mxu0 0.0
    %100 = vmatpush1.msra.mxu0 0.0
    %101 = vmatprep.subr.mxu0 0.0
    %102 = vmatpush1.msra.mxu0 0.0
    %103 = vmatprep.subr.mxu0 0.0
    %104 = vmatpush1.msra.mxu0 0.0
    %105 = vmatprep.subr.mxu0 0.0
    %106 = vmatpush1.msra.mxu0 0.0
    %107 = vmatprep.subr.mxu0 0.0
    %108 = vmatpush1.msra.mxu0 0.0
    %109 = vmatprep.subr.mxu0 0.0
    %110 = vmatpush1.msra.mxu0 0.0
    %111 = vmatprep.subr.mxu0 0.0
    %112 = vmatpush1.msra.mxu0 0.0
    %113 = vmatprep.subr.mxu0 0.0
    %114 = vmatpush1.msra.mxu0 0.0
    %115 = vmatprep.subr.mxu0 0.0
    %116 = vmatpush1.msra.mxu0 0.0
    %117 = vmatprep.subr.mxu0 0.0
    %118 = vmatpush1.msra.mxu0 0.0
    %119 = vmatprep.subr.mxu0 %v57
    %120 = vmatpush1.msra.mxu0 %v56
    %121 = vmatprep.subr.mxu0 %v55
    %122 = vmatpush1.msra.mxu0 %v54
    %123 = vmatprep.subr.mxu0 %v53
    %124 = vmatpush1.msra.mxu0 %v52
    %125 = vmatprep.subr.mxu0 %v51
    %126 = vmatpush1.msra.mxu0 %v50
    %127 = vmatprep.subr.mxu0 0.0
    %128 = vmatpush2.msra.mxu0 0.0
    %129 = vmatprep.subr.mxu0 0.0
    %130 = vmatpush2.msra.mxu0 0.0
    %131 = vmatprep.subr.mxu0 0.0
    %132 = vmatpush2.msra.mxu0 0.0
    %133 = vmatprep.subr.mxu0 0.0
    %134 = vmatpush2.msra.mxu0 0.0
    %135 = vmatprep.subr.mxu0 0.0
    %136 = vmatpush2.msra.mxu0 0.0
    %137 = vmatprep.subr.mxu0 0.0
    %138 = vmatpush2.msra.mxu0 0.0
    %139 = vmatprep.subr.mxu0 0.0
    %140 = vmatpush2.msra.mxu0 0.0
    %141 = vmatprep.subr.mxu0 0.0
    %142 = vmatpush2.msra.mxu0 0.0
    %143 = vmatprep.subr.mxu0 0.0
    %144 = vmatpush2.msra.mxu0 0.0
    %145 = vmatprep.subr.mxu0 0.0
    %146 = vmatpush2.msra.mxu0 0.0
    %147 = vmatprep.subr.mxu0 0.0
    %148 = vmatpush2.msra.mxu0 0.0
    %149 = vmatprep.subr.mxu0 0.0
    %150 = vmatpush2.msra.mxu0 0.0
    %151 = vmatprep.subr.mxu0 0.0
    %152 = vmatpush2.msra.mxu0 0.0
    %153 = vmatprep.subr.mxu0 0.0
    %154 = vmatpush2.msra.mxu0 0.0
    %155 = vmatprep.subr.mxu0 0.0
    %156 = vmatpush2.msra.mxu0 0.0
    %157 = vmatprep.subr.mxu0 0.0
    %158 = vmatpush2.msra.mxu0 0.0
    %159 = vmatprep.mubr.f32.mxu0 0.0
    %160 = vmatmul.mubr.f32.gmra.mxu0 %v72
    %v161 = vpop.f32.mrf.mxu0
    %v162 = vadd.f32 %v63, %v161
    %v163 = vpop.f32.mrf.mxu0
    %v164 = vadd.f32 %v67, %v163
    %165 = vmatprep.mubr.f32.mxu0 0.0
    %166 = vmatmul.mubr.f32.gmra.mxu0 %v75
    %v167 = vpop.f32.mrf.mxu0
    %v168 = vadd.f32 %v63, %v167
    %v169 = vpop.f32.mrf.mxu0
    %v170 = vadd.f32 %v67, %v169
    %171 = vmatprep.mubr.f32.mxu0 0.0
    %172 = vmatmul.mubr.f32.gmra.mxu0 %v78
    %v173 = vpop.f32.mrf.mxu0
    %v174 = vadd.f32 %v63, %v173
    %v175 = vpop.f32.mrf.mxu0
    %v176 = vadd.f32 %v67, %v175
    %177 = vmatprep.mubr.f32.mxu0 0.0
    %178 = vmatmul.mubr.f32.gmra.mxu0 %v81
    %v179 = vpop.f32.mrf.mxu0
    %v180 = vadd.f32 %v63, %v179
    %v181 = vpop.f32.mrf.mxu0
    %v182 = vadd.f32 %v67, %v181
    %183 = vmatprep.mubr.f32.mxu0 0.0
    %184 = vmatmul.mubr.f32.gmra.mxu0 %v84
    %v185 = vpop.f32.mrf.mxu0
    %v186 = vadd.f32 %v63, %v185
    %v187 = vpop.f32.mrf.mxu0
    %v188 = vadd.f32 %v67, %v187
    %189 = vmatprep.mubr.f32.mxu0 0.0
    %190 = vmatmul.mubr.f32.gmra.mxu0 %v87
    %v191 = vpop.f32.mrf.mxu0
    %v192 = vadd.f32 %v63, %v191
    %v193 = vpop.f32.mrf.mxu0
    %v194 = vadd.f32 %v67, %v193
    %195 = vmatprep.mubr.f32.mxu0 0.0
    %196 = vmatmul.mubr.f32.gmra.mxu0 %v90
    %v197 = vpop.f32.mrf.mxu0
    %v198 = vadd.f32 %v63, %v197
    %v199 = vpop.f32.mrf.mxu0
    %v200 = vadd.f32 %v67, %v199
    %201 = vmatprep.mubr.f32.mxu0 0.0
    %202 = vmatmul.mubr.f32.gmra.mxu0 %v93
    %v203 = vpop.f32.mrf.mxu0
    %v204 = vadd.f32 %v63, %v203
    %v205 = vpop.f32.mrf.mxu0
    %v206 = vadd.f32 %v67, %v205
    %207 = vdwg.mxu0
    %v208 = vmax.f32 %v162, 0.0
    %v209 = vmax.f32 %v164, 0.0
    %v210 = vmax.f32 %v168, 0.0
    %v211 = vmax.f32 %v170, 0.0
    %v212 = vmax.f32 %v174, 0.0
    %v213 = vmax.f32 %v176, 0.0
    %v214 = vmax.f32 %v180, 0.0
    %v215 = vmax.f32 %v182, 0.0
    %v216 = vmax.f32 %v186, 0.0
    %v217 = vmax.f32 %v188, 0.0
    %v218 = vmax.f32 %v192, 0.0
    %v219 = vmax.f32 %v194, 0.0
    %v220 = vmax.f32 %v198, 0.0
    %v221 = vmax.f32 %v200, 0.0
    %v222 = vmax.f32 %v204, 0.0
    %v223 = vmax.f32 %v206, 0.0
    %v224 = vld [vmem:[#allocation2] sm:$0xff]
    %v225 = vld [vmem:[#allocation2 + $0x8] sm:$0xff]
    %v226 = vld [vmem:[#allocation2 + $0x10] sm:$0xff]
    %v227 = vld [vmem:[#allocation2 + $0x18] sm:$0xff]
    %v228 = vld [vmem:[#allocation2 + $0x20] sm:$0xff]
    %v229 = vld [vmem:[#allocation2 + $0x28] sm:$0xff]
    %v230 = vld [vmem:[#allocation2 + $0x30] sm:$0xff]
    %v231 = vld [vmem:[#allocation2 + $0x38] sm:$0xff]
    %v232 = vld [vmem:[#allocation2 + $0x40] sm:$0xff]
    %v233 = vld [vmem:[#allocation2 + $0x48] sm:$0xff]
    %v234 = vld [vmem:[#allocation2 + $0x50] sm:$0xff]
    %v235 = vld [vmem:[#allocation2 + $0x58] sm:$0xff]
    %v236 = vld [vmem:[#allocation2 + $0x60] sm:$0xff]
    %v237 = vld [vmem:[#allocation2 + $0x68] sm:$0xff]
    %v238 = vld [vmem:[#allocation2 + $0x70] sm:$0xff]
    %v239 = vld [vmem:[#allocation2 + $0x78] sm:$0xff]
    %v240 = vld [vmem:[#allocation2 + $0x80] sm:$0xff]
    %v241 = vld [vmem:[#allocation2 + $0x88] sm:$0xff]
    %v242 = vld [vmem:[#allocation2 + $0x90] sm:$0xff]
    %v243 = vld [vmem:[#allocation2 + $0x98] sm:$0xff]
    %v244 = vld [vmem:[#allocation2 + $0xa0] sm:$0xff]
    %v245 = vld [vmem:[#allocation2 + $0xa8] sm:$0xff]
    %v246 = vld [vmem:[#allocation2 + $0xb0] sm:$0xff]
    %v247 = vld [vmem:[#allocation2 + $0xb8] sm:$0xff]
    %v248 = vld [vmem:[#allocation2 + $0xc0] sm:$0xff]
    %v249 = vld [vmem:[#allocation2 + $0xc8] sm:$0xff]
    %v250 = vld [vmem:[#allocation2 + $0xd0] sm:$0xff]
    %v251 = vld [vmem:[#allocation2 + $0xd8] sm:$0xff]
    %v252 = vld [vmem:[#allocation2 + $0xe0] sm:$0xff]
    %v253 = vld [vmem:[#allocation2 + $0xe8] sm:$0xff]
    %v254 = vld [vmem:[#allocation2 + $0xf0] sm:$0xff]
    %v255 = vld [vmem:[#allocation2 + $0xf8] sm:$0xff]
    %v256 = vld [vmem:[#allocation2 + $0x100] sm:$0xff]
    %v257 = vld [vmem:[#allocation2 + $0x108] sm:$0xff]
    %v258 = vld [vmem:[#allocation2 + $0x110] sm:$0xff]
    %v259 = vld [vmem:[#allocation2 + $0x118] sm:$0xff]
    %v260 = vld [vmem:[#allocation2 + $0x120] sm:$0xff]
    %v261 = vld [vmem:[#allocation2 + $0x128] sm:$0xff]
    %v262 = vld [vmem:[#allocation2 + $0x130] sm:$0xff]
    %v263 = vld [vmem:[#allocation2 + $0x138] sm:$0xff]
    %v264 = vld [vmem:[#allocation2 + $0x140] sm:$0xff]
    %v265 = vld [vmem:[#allocation2 + $0x148] sm:$0xff]
    %v266 = vld [vmem:[#allocation2 + $0x150] sm:$0xff]
    %v267 = vld [vmem:[#allocation2 + $0x158] sm:$0xff]
    %v268 = vld [vmem:[#allocation2 + $0x160] sm:$0xff]
    %v269 = vld [vmem:[#allocation2 + $0x168] sm:$0xff]
    %v270 = vld [vmem:[#allocation2 + $0x170] sm:$0xff]
    %v271 = vld [vmem:[#allocation2 + $0x178] sm:$0xff]
    %v272 = vld [vmem:[#allocation2 + $0x180] sm:$0xff]
    %v273 = vld [vmem:[#allocation2 + $0x188] sm:$0xff]
    %v274 = vld [vmem:[#allocation2 + $0x190] sm:$0xff]
    %v275 = vld [vmem:[#allocation2 + $0x198] sm:$0xff]
    %v276 = vld [vmem:[#allocation2 + $0x1a0] sm:$0xff]
    %v277 = vld [vmem:[#allocation2 + $0x1a8] sm:$0xff]
    %v278 = vld [vmem:[#allocation2 + $0x1b0] sm:$0xff]
    %v279 = vld [vmem:[#allocation2 + $0x1b8] sm:$0xff]
    %v280 = vld [vmem:[#allocation2 + $0x1c0] sm:$0xff]
    %v281 = vld [vmem:[#allocation2 + $0x1c8] sm:$0xff]
    %v282 = vld [vmem:[#allocation2 + $0x1d0] sm:$0xff]
    %v283 = vld [vmem:[#allocation2 + $0x1d8] sm:$0xff]
    %v284 = vld [vmem:[#allocation2 + $0x1e0] sm:$0xff]
    %v285 = vld [vmem:[#allocation2 + $0x1e8] sm:$0xff]
    %v286 = vld [vmem:[#allocation2 + $0x1f0] sm:$0xff]
    %v287 = vld [vmem:[#allocation2 + $0x1f8] sm:$0xff]
    %v288 = vld [vmem:[%s4] sm:$0x3]
    %v290 = vlaneseq
    %v291 = vshrl.u32 %v290, 7
    %v292 = vsub.s32 0, %v291
    %v293 = vrot.slane %v288, %v292
    %v294 = vlaneseq
    %v295 = vshrl.u32 %v294, 7
    %v296 = vsub.s32 1, %v295
    %v297 = vrot.slane %v288, %v296
    %300 = vmatprep.subr.mxu0 %v255
    %301 = vmatpush1.msra.mxu0 %v254
    %302 = vmatprep.subr.mxu0 %v253
    %303 = vmatpush1.msra.mxu0 %v252
    %304 = vmatprep.subr.mxu0 %v251
    %305 = vmatpush1.msra.mxu0 %v250
    %306 = vmatprep.subr.mxu0 %v249
    %307 = vmatpush1.msra.mxu0 %v248
    %308 = vmatprep.subr.mxu0 %v247
    %309 = vmatpush1.msra.mxu0 %v246
    %310 = vmatprep.subr.mxu0 %v245
    %311 = vmatpush1.msra.mxu0 %v244
    %312 = vmatprep.subr.mxu0 %v243
    %313 = vmatpush1.msra.mxu0 %v242
    %314 = vmatprep.subr.mxu0 %v241
    %315 = vmatpush1.msra.mxu0 %v240
    %316 = vmatprep.subr.mxu0 %v239
    %317 = vmatpush1.msra.mxu0 %v238
    %318 = vmatprep.subr.mxu0 %v237
    %319 = vmatpush1.msra.mxu0 %v236
    %320 = vmatprep.subr.mxu0 %v235
    %321 = vmatpush1.msra.mxu0 %v234
    %322 = vmatprep.subr.mxu0 %v233
    %323 = vmatpush1.msra.mxu0 %v232
    %324 = vmatprep.subr.mxu0 %v231
    %325 = vmatpush1.msra.mxu0 %v230
    %326 = vmatprep.subr.mxu0 %v229
    %327 = vmatpush1.msra.mxu0 %v228
    %328 = vmatprep.subr.mxu0 %v227
    %329 = vmatpush1.msra.mxu0 %v226
    %330 = vmatprep.subr.mxu0 %v225
    %331 = vmatpush1.msra.mxu0 %v224
    %332 = vmatprep.subr.mxu0 %v287
    %333 = vmatpush2.msra.mxu0 %v286
    %334 = vmatprep.subr.mxu0 %v285
    %335 = vmatpush2.msra.mxu0 %v284
    %336 = vmatprep.subr.mxu0 %v283
    %337 = vmatpush2.msra.mxu0 %v282
    %338 = vmatprep.subr.mxu0 %v281
    %339 = vmatpush2.msra.mxu0 %v280
    %340 = vmatprep.subr.mxu0 %v279
    %341 = vmatpush2.msra.mxu0 %v278
    %342 = vmatprep.subr.mxu0 %v277
    %343 = vmatpush2.msra.mxu0 %v276
    %344 = vmatprep.subr.mxu0 %v275
    %345 = vmatpush2.msra.mxu0 %v274
    %346 = vmatprep.subr.mxu0 %v273
    %347 = vmatpush2.msra.mxu0 %v272
    %348 = vmatprep.subr.mxu0 %v271
    %349 = vmatpush2.msra.mxu0 %v270
    %350 = vmatprep.subr.mxu0 %v269
    %351 = vmatpush2.msra.mxu0 %v268
    %352 = vmatprep.subr.mxu0 %v267
    %353 = vmatpush2.msra.mxu0 %v266
    %354 = vmatprep.subr.mxu0 %v265
    %355 = vmatpush2.msra.mxu0 %v264
    %356 = vmatprep.subr.mxu0 %v263
    %357 = vmatpush2.msra.mxu0 %v262
    %358 = vmatprep.subr.mxu0 %v261
    %359 = vmatpush2.msra.mxu0 %v260
    %360 = vmatprep.subr.mxu0 %v259
    %361 = vmatpush2.msra.mxu0 %v258
    %362 = vmatprep.subr.mxu0 %v257
    %363 = vmatpush2.msra.mxu0 %v256
    %364 = vmatprep.mubr.f32.mxu0 %v209
    %365 = vmatmul.mubr.f32.gmra.mxu0 %v208
    %v366 = vpop.f32.mrf.mxu0
    %v367 = vadd.f32 %v293, %v366
    %v368 = vpop.f32.mrf.mxu0
    %v369 = vadd.f32 %v297, %v368
    %370 = vmatprep.mubr.f32.mxu0 %v211
    %371 = vmatmul.mubr.f32.gmra.mxu0 %v210
    %v372 = vpop.f32.mrf.mxu0
    %v373 = vadd.f32 %v293, %v372
    %v374 = vpop.f32.mrf.mxu0
    %v375 = vadd.f32 %v297, %v374
    %376 = vmatprep.mubr.f32.mxu0 %v213
    %377 = vmatmul.mubr.f32.gmra.mxu0 %v212
    %v378 = vpop.f32.mrf.mxu0
    %v379 = vadd.f32 %v293, %v378
    %v380 = vpop.f32.mrf.mxu0
    %v381 = vadd.f32 %v297, %v380
    %382 = vmatprep.mubr.f32.mxu0 %v215
    %383 = vmatmul.mubr.f32.gmra.mxu0 %v214
    %v384 = vpop.f32.mrf.mxu0
    %v385 = vadd.f32 %v293, %v384
    %v386 = vpop.f32.mrf.mxu0
    %v387 = vadd.f32 %v297, %v386
    %388 = vmatprep.mubr.f32.mxu0 %v217
    %389 = vmatmul.mubr.f32.gmra.mxu0 %v216
    %v390 = vpop.f32.mrf.mxu0
    %v391 = vadd.f32 %v293, %v390
    %v392 = vpop.f32.mrf.mxu0
    %v393 = vadd.f32 %v297, %v392
    %394 = vmatprep.mubr.f32.mxu0 %v219
    %395 = vmatmul.mubr.f32.gmra.mxu0 %v218
    %v396 = vpop.f32.mrf.mxu0
    %v397 = vadd.f32 %v293, %v396
    %v398 = vpop.f32.mrf.mxu0
    %v399 = vadd.f32 %v297, %v398
    %400 = vmatprep.mubr.f32.mxu0 %v221
    %401 = vmatmul.mubr.f32.gmra.mxu0 %v220
    %v402 = vpop.f32.mrf.mxu0
    %v403 = vadd.f32 %v293, %v402
    %v404 = vpop.f32.mrf.mxu0
    %v405 = vadd.f32 %v297, %v404
    %406 = vmatprep.mubr.f32.mxu0 %v223
    %407 = vmatmul.mubr.f32.gmra.mxu0 %v222
    %v408 = vpop.f32.mrf.mxu0
    %v409 = vadd.f32 %v293, %v408
    %v410 = vpop.f32.mrf.mxu0
    %v411 = vadd.f32 %v297, %v410
    %412 = vdwg.mxu0
    %v413 = vmax.f32 %v367, 0.0
    %v414 = vmax.f32 %v369, 0.0
    %v415 = vmax.f32 %v373, 0.0
    %v416 = vmax.f32 %v375, 0.0
    %v417 = vmax.f32 %v379, 0.0
    %v418 = vmax.f32 %v381, 0.0
    %v419 = vmax.f32 %v385, 0.0
    %v420 = vmax.f32 %v387, 0.0
    %v421 = vmax.f32 %v391, 0.0
    %v422 = vmax.f32 %v393, 0.0
    %v423 = vmax.f32 %v397, 0.0
    %v424 = vmax.f32 %v399, 0.0
    %v425 = vmax.f32 %v403, 0.0
    %v426 = vmax.f32 %v405, 0.0
    %v427 = vmax.f32 %v409, 0.0
    %v428 = vmax.f32 %v411, 0.0
    %v429 = vld [vmem:[%s5] sm:$0xff]
    %v430 = vld [vmem:[%s5 + $0x8] sm:$0xff]
    %v431 = vld [vmem:[%s5 + $0x10] sm:$0xff]
    %v432 = vld [vmem:[%s5 + $0x18] sm:$0xff]
    %v433 = vld [vmem:[%s5 + $0x20] sm:$0xff]
    %v434 = vld [vmem:[%s5 + $0x28] sm:$0xff]
    %v435 = vld [vmem:[%s5 + $0x30] sm:$0xff]
    %v436 = vld [vmem:[%s5 + $0x38] sm:$0xff]
    %v437 = vld [vmem:[%s5 + $0x40] sm:$0xff]
    %v438 = vld [vmem:[%s5 + $0x48] sm:$0xff]
    %v439 = vld [vmem:[%s5 + $0x50] sm:$0xff]
    %v440 = vld [vmem:[%s5 + $0x58] sm:$0xff]
    %v441 = vld [vmem:[%s5 + $0x60] sm:$0xff]
    %v442 = vld [vmem:[%s5 + $0x68] sm:$0xff]
    %v443 = vld [vmem:[%s5 + $0x70] sm:$0xff]
    %v444 = vld [vmem:[%s5 + $0x78] sm:$0xff]
    %v445 = vld [vmem:[%s5 + $0x80] sm:$0xff]
    %v446 = vld [vmem:[%s5 + $0x88] sm:$0xff]
    %v447 = vld [vmem:[%s5 + $0x90] sm:$0xff]
    %v448 = vld [vmem:[%s5 + $0x98] sm:$0xff]
    %v449 = vld [vmem:[%s5 + $0xa0] sm:$0xff]
    %v450 = vld [vmem:[%s5 + $0xa8] sm:$0xff]
    %v451 = vld [vmem:[%s5 + $0xb0] sm:$0xff]
    %v452 = vld [vmem:[%s5 + $0xb8] sm:$0xff]
    %v453 = vld [vmem:[%s5 + $0xc0] sm:$0xff]
    %v454 = vld [vmem:[%s5 + $0xc8] sm:$0xff]
    %v455 = vld [vmem:[%s5 + $0xd0] sm:$0xff]
    %v456 = vld [vmem:[%s5 + $0xd8] sm:$0xff]
    %v457 = vld [vmem:[%s5 + $0xe0] sm:$0xff]
    %v458 = vld [vmem:[%s5 + $0xe8] sm:$0xff]
    %v459 = vld [vmem:[%s5 + $0xf0] sm:$0xff]
    %v460 = vld [vmem:[%s5 + $0xf8] sm:$0xff]
    %v461 = vld [vmem:[%s6] sm:$0x1]
    %v463 = vlaneseq
    %v464 = vshrl.u32 %v463, 7
    %v465 = vsub.s32 0, %v464
    %v466 = vrot.slane %v461, %v465
    %468 = vmatprep.subr.mxu0 0.0
    %469 = vmatpush1.msra.mxu0 %v444
    %470 = vmatprep.subr.mxu0 0.0
    %471 = vmatpush1.msra.mxu0 %v443
    %472 = vmatprep.subr.mxu0 0.0
    %473 = vmatpush1.msra.mxu0 %v442
    %474 = vmatprep.subr.mxu0 0.0
    %475 = vmatpush1.msra.mxu0 %v441
    %476 = vmatprep.subr.mxu0 0.0
    %477 = vmatpush1.msra.mxu0 %v440
    %478 = vmatprep.subr.mxu0 0.0
    %479 = vmatpush1.msra.mxu0 %v439
    %480 = vmatprep.subr.mxu0 0.0
    %481 = vmatpush1.msra.mxu0 %v438
    %482 = vmatprep.subr.mxu0 0.0
    %483 = vmatpush1.msra.mxu0 %v437
    %484 = vmatprep.subr.mxu0 0.0
    %485 = vmatpush1.msra.mxu0 %v436
    %486 = vmatprep.subr.mxu0 0.0
    %487 = vmatpush1.msra.mxu0 %v435
    %488 = vmatprep.subr.mxu0 0.0
    %489 = vmatpush1.msra.mxu0 %v434
    %490 = vmatprep.subr.mxu0 0.0
    %491 = vmatpush1.msra.mxu0 %v433
    %492 = vmatprep.subr.mxu0 0.0
    %493 = vmatpush1.msra.mxu0 %v432
    %494 = vmatprep.subr.mxu0 0.0
    %495 = vmatpush1.msra.mxu0 %v431
    %496 = vmatprep.subr.mxu0 0.0
    %497 = vmatpush1.msra.mxu0 %v430
    %498 = vmatprep.subr.mxu0 0.0
    %499 = vmatpush1.msra.mxu0 %v429
    %500 = vmatprep.subr.mxu0 0.0
    %501 = vmatpush2.msra.mxu0 %v460
    %502 = vmatprep.subr.mxu0 0.0
    %503 = vmatpush2.msra.mxu0 %v459
    %504 = vmatprep.subr.mxu0 0.0
    %505 = vmatpush2.msra.mxu0 %v458
    %506 = vmatprep.subr.mxu0 0.0
    %507 = vmatpush2.msra.mxu0 %v457
    %508 = vmatprep.subr.mxu0 0.0
    %509 = vmatpush2.msra.mxu0 %v456
    %510 = vmatprep.subr.mxu0 0.0
    %511 = vmatpush2.msra.mxu0 %v455
    %512 = vmatprep.subr.mxu0 0.0
    %513 = vmatpush2.msra.mxu0 %v454
    %514 = vmatprep.subr.mxu0 0.0
    %515 = vmatpush2.msra.mxu0 %v453
    %516 = vmatprep.subr.mxu0 0.0
    %517 = vmatpush2.msra.mxu0 %v452
    %518 = vmatprep.subr.mxu0 0.0
    %519 = vmatpush2.msra.mxu0 %v451
    %520 = vmatprep.subr.mxu0 0.0
    %521 = vmatpush2.msra.mxu0 %v450
    %522 = vmatprep.subr.mxu0 0.0
    %523 = vmatpush2.msra.mxu0 %v449
    %524 = vmatprep.subr.mxu0 0.0
    %525 = vmatpush2.msra.mxu0 %v448
    %526 = vmatprep.subr.mxu0 0.0
    %527 = vmatpush2.msra.mxu0 %v447
    %528 = vmatprep.subr.mxu0 0.0
    %529 = vmatpush2.msra.mxu0 %v446
    %530 = vmatprep.subr.mxu0 0.0
    %531 = vmatpush2.msra.mxu0 %v445
    %532 = vmatprep.mubr.f32.mxu0 %v414
    %533 = vmatmul.mubr.f32.gmra.mxu0 %v413
    %v534 = vpop.f32.mrf.mxu0
    %v535 = vadd.f32 %v466, %v534
    %v536 = vpop.f32.mrf.mxu0
    %537 = vmatprep.mubr.f32.mxu0 %v416
    %538 = vmatmul.mubr.f32.gmra.mxu0 %v415
    %v539 = vpop.f32.mrf.mxu0
    %v540 = vadd.f32 %v466, %v539
    %v541 = vpop.f32.mrf.mxu0
    %542 = vmatprep.mubr.f32.mxu0 %v418
    %543 = vmatmul.mubr.f32.gmra.mxu0 %v417
    %v544 = vpop.f32.mrf.mxu0
    %v545 = vadd.f32 %v466, %v544
    %v546 = vpop.f32.mrf.mxu0
    %547 = vmatprep.mubr.f32.mxu0 %v420
    %548 = vmatmul.mubr.f32.gmra.mxu0 %v419
    %v549 = vpop.f32.mrf.mxu0
    %v550 = vadd.f32 %v466, %v549
    %v551 = vpop.f32.mrf.mxu0
    %552 = vmatprep.mubr.f32.mxu0 %v422
    %553 = vmatmul.mubr.f32.gmra.mxu0 %v421
    %v554 = vpop.f32.mrf.mxu0
    %v555 = vadd.f32 %v466, %v554
    %v556 = vpop.f32.mrf.mxu0
    %557 = vmatprep.mubr.f32.mxu0 %v424
    %558 = vmatmul.mubr.f32.gmra.mxu0 %v423
    %v559 = vpop.f32.mrf.mxu0
    %v560 = vadd.f32 %v466, %v559
    %v561 = vpop.f32.mrf.mxu0
    %562 = vmatprep.mubr.f32.mxu0 %v426
    %563 = vmatmul.mubr.f32.gmra.mxu0 %v425
    %v564 = vpop.f32.mrf.mxu0
    %v565 = vadd.f32 %v466, %v564
    %v566 = vpop.f32.mrf.mxu0
    %567 = vmatprep.mubr.f32.mxu0 %v428
    %568 = vmatmul.mubr.f32.gmra.mxu0 %v427
    %v569 = vpop.f32.mrf.mxu0
    %v570 = vadd.f32 %v466, %v569
    %v571 = vpop.f32.mrf.mxu0
    %572 = vdwg.mxu0
    %v573 = vtanh.pop %v535
    %v574 = vtanh.pop %v540
    %v575 = vtanh.pop %v545
    %v576 = vtanh.pop %v550
    %v577 = vtanh.pop %v555
    %v578 = vtanh.pop %v560
    %v579 = vtanh.pop %v565
    %v580 = vtanh.pop %v570
    %vm581 = vcmask 31744
    %582 = vst.msk [vmem:[%s7] sm:$0xff] %vm581, %v573
    %583 = vst.msk [vmem:[%s7 + $0x8] sm:$0xff] %vm581, %v574
    %584 = vst.msk [vmem:[%s7 + $0x10] sm:$0xff] %vm581, %v575
    %585 = vst.msk [vmem:[%s7 + $0x18] sm:$0xff] %vm581, %v576
    %586 = vst.msk [vmem:[%s7 + $0x20] sm:$0xff] %vm581, %v577
    %587 = vst.msk [vmem:[%s7 + $0x28] sm:$0xff] %vm581, %v578
    %588 = vst.msk [vmem:[%s7 + $0x30] sm:$0xff] %vm581, %v579
    %589 = vst.msk [vmem:[%s7 + $0x38] sm:$0xff] %vm581, %v580
    %v590 = vmul.f32 %v573, 3.5
    %v591 = vmul.f32 %v574, 3.5
    %v592 = vmul.f32 %v575, 3.5
    %v593 = vmul.f32 %v576, 3.5
    %v594 = vmul.f32 %v577, 3.5
    %v595 = vmul.f32 %v578, 3.5
    %v596 = vmul.f32 %v579, 3.5
    %v597 = vmul.f32 %v580, 3.5
    %v598 = vadd.f32 %v590, -1.5
    %v599 = vadd.f32 %v591, -1.5
    %v600 = vadd.f32 %v592, -1.5
    %v601 = vadd.f32 %v593, -1.5
    %v602 = vadd.f32 %v594, -1.5
    %v603 = vadd.f32 %v595, -1.5
    %v604 = vadd.f32 %v596, -1.5
    %v605 = vadd.f32 %v597, -1.5
    %614 = vrot.lane.b32.xlu0 %v598, 124
    %v615 = vpop.permute.xlu0 %614
    %616 = vrot.lane.b32.xlu0 %v599, 124
    %v617 = vpop.permute.xlu0 %616
    %618 = vrot.lane.b32.xlu0 %v600, 124
    %v619 = vpop.permute.xlu0 %618
    %620 = vrot.lane.b32.xlu0 %v601, 124
    %v621 = vpop.permute.xlu0 %620
    %622 = vrot.lane.b32.xlu0 %v602, 124
    %v623 = vpop.permute.xlu0 %622
    %624 = vrot.lane.b32.xlu0 %v603, 124
    %v625 = vpop.permute.xlu0 %624
    %626 = vrot.lane.b32.xlu0 %v604, 124
    %v627 = vpop.permute.xlu0 %626
    %628 = vrot.lane.b32.xlu0 %v605, 124
    %v629 = vpop.permute.xlu0 %628
    %638 = vst.msk [vmem:[%s8] sm:$0xff] %vm581, %v615
    %639 = vst.msk [vmem:[%s8 + $0x8] sm:$0xff] %vm581, %v617
    %640 = vst.msk [vmem:[%s8 + $0x10] sm:$0xff] %vm581, %v619
    %641 = vst.msk [vmem:[%s8 + $0x18] sm:$0xff] %vm581, %v621
    %642 = vst.msk [vmem:[%s8 + $0x20] sm:$0xff] %vm581, %v623
    %643 = vst.msk [vmem:[%s8 + $0x28] sm:$0xff] %vm581, %v625
    %644 = vst.msk [vmem:[%s8 + $0x30] sm:$0xff] %vm581, %v627
    %645 = vst.msk [vmem:[%s8 + $0x38] sm:$0xff] %vm581, %v629
    // Predicated region
    $region34: #{tpu_custom_call.1} parent=1 // pred_check
      _
    $region35: #{tpu_custom_call.1} parent=1 // pred_check_branch
      %647 = sbr.rel (0) target = $region37
    $region36: #{tpu_custom_call.1} parent=1 // pred_region
      _
    $region37: #{tpu_custom_call.1} parent=1 // pred_fallthru
      _
    // Predicated region
    $region38: #{tpu_custom_call.1} parent=1 // pred_check
      _
    $region39: #{tpu_custom_call.1} parent=1 // pred_check_branch
      %649 = sbr.rel (0) target = $region41
    $region40: #{tpu_custom_call.1} parent=1 // pred_region
      _
    $region41: #{tpu_custom_call.1} parent=1 // pred_fallthru
      _
    // Predicated region
    $region42: #{tpu_custom_call.1} parent=1 // pred_check
      _
    $region43: #{tpu_custom_call.1} parent=1 // pred_check_branch
      %651 = sbr.rel (0) target = $region45
    $region44: #{tpu_custom_call.1} parent=1 // pred_region
      _
    $region45: #{tpu_custom_call.1} parent=1 // pred_fallthru
      _
    // Predicated region
    $region46: #{tpu_custom_call.1} parent=1 // pred_check
      _
    $region47: #{tpu_custom_call.1} parent=1 // pred_check_branch
      %653 = sbr.rel (0) target = $region49
    $region48: #{tpu_custom_call.1} parent=1 // pred_region
      _
    $region49: #{tpu_custom_call.1} parent=1 // pred_fallthru
      _
    %654 = vsyncpa [#allocation3], 1

</llo_original>
